<compile_context>
chip_gen: v6e
topology: v6e:2x2x1
jax: 0.10.0
libtpu: 0.0.40
codegen_flags: <defaults>
</compile_context>

<pallas_src>
import jax
import jax.numpy as jnp
from jax.experimental import pallas as pl
from jax.experimental.pallas import tpu as pltpu


def _interp_matrix(n_in, n_out):
    """(n_out, n_in) bilinear matrix matching PyTorch align_corners=True."""
    if n_out == 1:
        src = jnp.zeros((1,), jnp.float32)
    else:
        src = jnp.arange(n_out, dtype=jnp.float32) * ((n_in - 1) / (n_out - 1))
    i0 = jnp.clip(jnp.floor(src), 0, n_in - 1).astype(jnp.int32)
    i1 = jnp.minimum(i0 + 1, n_in - 1)
    frac = (src - i0.astype(jnp.float32))[:, None]
    eye = jnp.eye(n_in, dtype=jnp.float32)
    return (1.0 - frac) * eye[i0] + frac * eye[i1]


def _make_kernel(TC, out_dtype):
    def kernel(ah_ref, awt_ref, x_ref, o_ref):
        # ah_ref : (Ho, H)   row-interp matrix     (VMEM-resident, constant block)
        # awt_ref: (W, Wo)   col-interp matrix^T   (VMEM-resident, constant block)
        # x_ref  : (1, TC, H, W)    input channel tile (NCHW)
        # o_ref  : (1, TC, Ho, Wo)  output channel tile (NCHW)
        ah = ah_ref[...]
        awt = awt_ref[...]
        for t in range(TC):  # short unrolled channel loop
            x2d = x_ref[0, t].astype(jnp.float32)                           # (H, W)
            rows = jnp.dot(ah, x2d, preferred_element_type=jnp.float32)     # (Ho, W)
            out = jnp.dot(rows, awt, preferred_element_type=jnp.float32)    # (Ho, Wo)
            o_ref[0, t] = out.astype(out_dtype)
    return kernel


def upblock_upsample(x):
    """UpBlock(method='sample').forward: 2x bilinear upsample, align_corners=True.

    x: (B, C, H, W) float32 (NCHW, PyTorch layout) -> (B, C, 2H, 2W)
    """
    B, C, H, W = x.shape
    Ho, Wo = 2 * H, 2 * W

    a_h = _interp_matrix(H, Ho)       # (Ho, H)
    a_w_t = _interp_matrix(W, Wo).T   # (W, Wo)

    # Channel tile: amortize the ~0.35us/step overhead while keeping the
    # per-step (double-buffered) block small enough for every generation.
    itemsize = jnp.dtype(x.dtype).itemsize
    TC = 1
    for cand in (16, 8, 4, 2, 1):
        if C % cand == 0 and cand * (H * W + Ho * Wo) * itemsize <= 2 * 1024 * 1024:
            TC = cand
            break

    block_bytes = TC * (H * W + Ho * Wo) * itemsize
    # Explicit VMEM budget: >= default scoped limits, <= v7x physical 64 MiB.
    vmem_limit = int(min(64 * 1024 * 1024, max(32 * 1024 * 1024, 6 * block_bytes)))

    kernel = _make_kernel(TC, x.dtype)

    return pl.pallas_call(
        kernel,
        out_shape=jax.ShapeDtypeStruct((B, C, Ho, Wo), x.dtype),
        grid_spec=pltpu.PrefetchScalarGridSpec(
            num_scalar_prefetch=0,
            grid=(B, C // TC),
            in_specs=[
                pl.BlockSpec((Ho, H), lambda b, c: (0, 0)),
                pl.BlockSpec((W, Wo), lambda b, c: (0, 0)),
                pl.BlockSpec((1, TC, H, W), lambda b, c: (b, c, 0, 0)),
            ],
            out_specs=pl.BlockSpec((1, TC, Ho, Wo), lambda b, c: (b, c, 0, 0)),
        ),
        compiler_params=pltpu.CompilerParams(
            dimension_semantics=("parallel", "parallel"),
            vmem_limit_bytes=vmem_limit,
        ),
    )(a_h, a_w_t, x)


# TODO(synk): UpBlock(method='deconv') (ConvTranspose2d k=2, s=2) branch is not
# used by the default constructor and is not implemented here.


def _reference(x):
    """Independent gather-based reference for nn.Upsample(2,'bilinear',align_corners=True)."""
    B, C, H, W = x.shape
    Ho, Wo = 2 * H, 2 * W

    def coords(n_in, n_out):
        if n_out == 1:
            src = jnp.zeros((1,), jnp.float32)
        else:
            src = jnp.arange(n_out, dtype=jnp.float32) * ((n_in - 1) / (n_out - 1))
        lo = jnp.clip(jnp.floor(src), 0, n_in - 1).astype(jnp.int32)
        hi = jnp.minimum(lo + 1, n_in - 1)
        return lo, hi, src - lo.astype(jnp.float32)

    y0, y1, fy = coords(H, Ho)
    x0, x1, fx = coords(W, Wo)
    rows = (x[:, :, y0, :] * (1.0 - fy)[None, None, :, None]
            + x[:, :, y1, :] * fy[None, None, :, None])           # (B, C, Ho, W)
    out = rows[:, :, :, x0] * (1.0 - fx) + rows[:, :, :, x1] * fx  # (B, C, Ho, Wo)
    return out


if __name__ == "__main__":
    key = jax.random.PRNGKey(0)
    B, C, H, W = 2, 4, 16, 16
    x = jax.random.normal(key, (B, C, H, W), dtype=jnp.float32)

    out = jax.block_until_ready(upblock_upsample(x))
    ref = jax.block_until_ready(_reference(x))

    assert out.shape == (B, C, 2 * H, 2 * W), out.shape
    assert jnp.allclose(out, ref, atol=1e-4, rtol=1e-4), \
        float(jnp.max(jnp.abs(out - ref)))
    print("KERNEL_OK")
</pallas_src>

<mosaic_0001>
module attributes {stable_mosaic.version = 11 : i64} {
  func.func @kernel(%arg0: i32, %arg1: i32, %arg2: memref<32x16xf32, #tpu.memory_space<vmem>>, %arg3: memref<16x32xf32, #tpu.memory_space<vmem>>, %arg4: memref<1x4x16x16xf32, #tpu.memory_space<vmem>>, %arg5: memref<1x4x32x32xf32, #tpu.memory_space<vmem>>) attributes {dimension_semantics = [#tpu.dimension_semantics<parallel>, #tpu.dimension_semantics<parallel>], iteration_bounds = array<i64: 2, 1>, scalar_prefetch = 0 : i64, scratch_operands = 0 : i64, tpu.core_type = #tpu.core_type<tc>, window_params = [{pipeline_mode = #tpu.pipeline_mode<synchronous>, transform_indices = @transform_0, window_bounds = array<i64: 32, 16>}, {pipeline_mode = #tpu.pipeline_mode<synchronous>, transform_indices = @transform_1, window_bounds = array<i64: 16, 32>}, {transform_indices = @transform_2, window_bounds = array<i64: 1, 4, 16, 16>}, {transform_indices = @transform_3, window_bounds = array<i64: 1, 4, 32, 32>}]} {
    %c0 = arith.constant 0 : index
    %c0_0 = arith.constant 0 : index
    %0 = vector.load %arg2[%c0, %c0_0] : memref<32x16xf32, #tpu.memory_space<vmem>>, vector<32x16xf32>
    %c0_1 = arith.constant 0 : index
    %c0_2 = arith.constant 0 : index
    %1 = vector.load %arg3[%c0_1, %c0_2] : memref<16x32xf32, #tpu.memory_space<vmem>>, vector<16x32xf32>
    %c0_3 = arith.constant 0 : index
    %c0_4 = arith.constant 0 : index
    %c0_5 = arith.constant 0 : index
    %c0_6 = arith.constant 0 : index
    %2 = vector.load %arg4[%c0_3, %c0_4, %c0_5, %c0_6] : memref<1x4x16x16xf32, #tpu.memory_space<vmem>>, vector<1x1x16x16xf32>
    %3 = vector.shape_cast %2 : vector<1x1x16x16xf32> to vector<16x16xf32>
    %cst = arith.constant dense<0.000000e+00> : vector<32x16xf32>
    %4 = tpu.matmul %0, %3, %cst {dimension_numbers = #tpu.dot_dimension_numbers<[1], [0], [0], [1], [0, 0, 1, 1], [], []>} : vector<32x16xf32>, vector<16x16xf32>, vector<32x16xf32> -> vector<32x16xf32>
    %cst_7 = arith.constant dense<0.000000e+00> : vector<32x32xf32>
    %5 = tpu.matmul %4, %1, %cst_7 {dimension_numbers = #tpu.dot_dimension_numbers<[1], [0], [0], [1], [0, 0, 1, 1], [], []>} : vector<32x16xf32>, vector<16x32xf32>, vector<32x32xf32> -> vector<32x32xf32>
    %c0_8 = arith.constant 0 : index
    %c0_9 = arith.constant 0 : index
    %c0_10 = arith.constant 0 : index
    %c0_11 = arith.constant 0 : index
    %6 = vector.load %arg5[%c0_8, %c0_9, %c0_10, %c0_11] : memref<1x4x32x32xf32, #tpu.memory_space<vmem>>, vector<1x1x32x32xf32>
    %7 = vector.shape_cast %6 : vector<1x1x32x32xf32> to vector<32x32xf32>
    %8 = vector.shape_cast %5 : vector<32x32xf32> to vector<1x1x32x32xf32>
    tpu.vector_store %arg5[%c0_8, %c0_9, %c0_10, %c0_11], %8 {strides = array<i32>} : memref<1x4x32x32xf32, #tpu.memory_space<vmem>>, vector<1x1x32x32xf32>,
    %c0_12 = arith.constant 0 : index
    %c1 = arith.constant 1 : index
    %c0_13 = arith.constant 0 : index
    %c0_14 = arith.constant 0 : index
    %9 = vector.load %arg4[%c0_12, %c1, %c0_13, %c0_14] : memref<1x4x16x16xf32, #tpu.memory_space<vmem>>, vector<1x1x16x16xf32>
    %10 = vector.shape_cast %9 : vector<1x1x16x16xf32> to vector<16x16xf32>
    %cst_15 = arith.constant dense<0.000000e+00> : vector<32x16xf32>
    %11 = tpu.matmul %0, %10, %cst_15 {dimension_numbers = #tpu.dot_dimension_numbers<[1], [0], [0], [1], [0, 0, 1, 1], [], []>} : vector<32x16xf32>, vector<16x16xf32>, vector<32x16xf32> -> vector<32x16xf32>
    %cst_16 = arith.constant dense<0.000000e+00> : vector<32x32xf32>
    %12 = tpu.matmul %11, %1, %cst_16 {dimension_numbers = #tpu.dot_dimension_numbers<[1], [0], [0], [1], [0, 0, 1, 1], [], []>} : vector<32x16xf32>, vector<16x32xf32>, vector<32x32xf32> -> vector<32x32xf32>
    %c0_17 = arith.constant 0 : index
    %c1_18 = arith.constant 1 : index
    %c0_19 = arith.constant 0 : index
    %c0_20 = arith.constant 0 : index
    %13 = vector.load %arg5[%c0_17, %c1_18, %c0_19, %c0_20] : memref<1x4x32x32xf32, #tpu.memory_space<vmem>>, vector<1x1x32x32xf32>
    %14 = vector.shape_cast %13 : vector<1x1x32x32xf32> to vector<32x32xf32>
    %15 = vector.shape_cast %12 : vector<32x32xf32> to vector<1x1x32x32xf32>
    tpu.vector_store %arg5[%c0_17, %c1_18, %c0_19, %c0_20], %15 {strides = array<i32>} : memref<1x4x32x32xf32, #tpu.memory_space<vmem>>, vector<1x1x32x32xf32>,
    %c0_21 = arith.constant 0 : index
    %c2 = arith.constant 2 : index
    %c0_22 = arith.constant 0 : index
    %c0_23 = arith.constant 0 : index
    %16 = vector.load %arg4[%c0_21, %c2, %c0_22, %c0_23] : memref<1x4x16x16xf32, #tpu.memory_space<vmem>>, vector<1x1x16x16xf32>
    %17 = vector.shape_cast %16 : vector<1x1x16x16xf32> to vector<16x16xf32>
    %cst_24 = arith.constant dense<0.000000e+00> : vector<32x16xf32>
    %18 = tpu.matmul %0, %17, %cst_24 {dimension_numbers = #tpu.dot_dimension_numbers<[1], [0], [0], [1], [0, 0, 1, 1], [], []>} : vector<32x16xf32>, vector<16x16xf32>, vector<32x16xf32> -> vector<32x16xf32>
    %cst_25 = arith.constant dense<0.000000e+00> : vector<32x32xf32>
    %19 = tpu.matmul %18, %1, %cst_25 {dimension_numbers = #tpu.dot_dimension_numbers<[1], [0], [0], [1], [0, 0, 1, 1], [], []>} : vector<32x16xf32>, vector<16x32xf32>, vector<32x32xf32> -> vector<32x32xf32>
    %c0_26 = arith.constant 0 : index
    %c2_27 = arith.constant 2 : index
    %c0_28 = arith.constant 0 : index
    %c0_29 = arith.constant 0 : index
    %20 = vector.load %arg5[%c0_26, %c2_27, %c0_28, %c0_29] : memref<1x4x32x32xf32, #tpu.memory_space<vmem>>, vector<1x1x32x32xf32>
    %21 = vector.shape_cast %20 : vector<1x1x32x32xf32> to vector<32x32xf32>
    %22 = vector.shape_cast %19 : vector<32x32xf32> to vector<1x1x32x32xf32>
    tpu.vector_store %arg5[%c0_26, %c2_27, %c0_28, %c0_29], %22 {strides = array<i32>} : memref<1x4x32x32xf32, #tpu.memory_space<vmem>>, vector<1x1x32x32xf32>,
    %c0_30 = arith.constant 0 : index
    %c3 = arith.constant 3 : index
    %c0_31 = arith.constant 0 : index
    %c0_32 = arith.constant 0 : index
    %23 = vector.load %arg4[%c0_30, %c3, %c0_31, %c0_32] : memref<1x4x16x16xf32, #tpu.memory_space<vmem>>, vector<1x1x16x16xf32>
    %24 = vector.shape_cast %23 : vector<1x1x16x16xf32> to vector<16x16xf32>
    %cst_33 = arith.constant dense<0.000000e+00> : vector<32x16xf32>
    %25 = tpu.matmul %0, %24, %cst_33 {dimension_numbers = #tpu.dot_dimension_numbers<[1], [0], [0], [1], [0, 0, 1, 1], [], []>} : vector<32x16xf32>, vector<16x16xf32>, vector<32x16xf32> -> vector<32x16xf32>
    %cst_34 = arith.constant dense<0.000000e+00> : vector<32x32xf32>
    %26 = tpu.matmul %25, %1, %cst_34 {dimension_numbers = #tpu.dot_dimension_numbers<[1], [0], [0], [1], [0, 0, 1, 1], [], []>} : vector<32x16xf32>, vector<16x32xf32>, vector<32x32xf32> -> vector<32x32xf32>
    %c0_35 = arith.constant 0 : index
    %c3_36 = arith.constant 3 : index
    %c0_37 = arith.constant 0 : index
    %c0_38 = arith.constant 0 : index
    %27 = vector.load %arg5[%c0_35, %c3_36, %c0_37, %c0_38] : memref<1x4x32x32xf32, #tpu.memory_space<vmem>>, vector<1x1x32x32xf32>
    %28 = vector.shape_cast %27 : vector<1x1x32x32xf32> to vector<32x32xf32>
    %29 = vector.shape_cast %26 : vector<32x32xf32> to vector<1x1x32x32xf32>
    tpu.vector_store %arg5[%c0_35, %c3_36, %c0_37, %c0_38], %29 {strides = array<i32>} : memref<1x4x32x32xf32, #tpu.memory_space<vmem>>, vector<1x1x32x32xf32>,
    return
  }
  func.func @transform_0(%arg0: i32, %arg1: i32) -> (i32, i32) {
    %c0_i32 = arith.constant 0 : i32
    %c0_i32_0 = arith.constant 0 : i32
    %c0_i32_1 = arith.constant 0 : i32
    return %c0_i32, %c0_i32_0 : i32, i32
  }
  func.func @transform_1(%arg0: i32, %arg1: i32) -> (i32, i32) {
    %c0_i32 = arith.constant 0 : i32
    %c0_i32_0 = arith.constant 0 : i32
    %c0_i32_1 = arith.constant 0 : i32
    return %c0_i32, %c0_i32_0 : i32, i32
  }
  func.func @transform_2(%arg0: i32, %arg1: i32) -> (i32, i32, i32, i32) {
    %c0_i32 = arith.constant 0 : i32
    %c0_i32_0 = arith.constant 0 : i32
    %c0_i32_1 = arith.constant 0 : i32
    return %arg0, %arg1, %c0_i32, %c0_i32_0 : i32, i32, i32, i32
  }
  func.func @transform_3(%arg0: i32, %arg1: i32) -> (i32, i32, i32, i32) {
    %c0_i32 = arith.constant 0 : i32
    %c0_i32_0 = arith.constant 0 : i32
    %c0_i32_1 = arith.constant 0 : i32
    return %arg0, %arg1, %c0_i32, %c0_i32_0 : i32, i32, i32, i32
  }
}

</mosaic_0001>

<llo_original>
// kernel: tpu_custom_call.1
$region0: #{tpu_custom_call.1}
  #allocation0 [shape = 'u32[]', space=smem, size = 0x4, offset = 0x4, fixed_abs, tag = 'smem constant byte address 0x4 - core index']
  #allocation1 [shape = 'u32[144,128]{1,0:T(1,128)}', space=vmem, size = 0x12000, scoped, tag = 'internal scratch']
  %s0 = inlined_call_operand.vmem [shape: f32[32,16], index: 0, kind: input, shape index: {}]
  %s1 = inlined_call_operand.vmem [shape: f32[16,32], index: 1, kind: input, shape index: {}]
  %s2 = inlined_call_operand.hbm [shape: f32[2,4,16,16], index: 2, kind: input, shape index: {}]
  %s3 = inlined_call_operand.hbm [shape: f32[2,4,32,32], index: 3, kind: output, shape index: {}]
  %s4 = sld [smem:[#allocation0]]
  $region49: #{tpu_custom_call.1} parent=0
    _
  %s6 = ssub.s32 1, %s4
  %s7 = scalar_select 0, %s6, %s4
  $region1: #{tpu_custom_call.1} parent=0
    #allocation2 [shape = 'u8[65536]{0}', space=vmem, size = 0x10000, scoped, tag = 'input window, operand 2']
    #allocation3 [shape = 's32[2]{0}', space=sflag, size = 0x8, scoped, tag = 'scoped memory for tpu_custom_call.1']
    #allocation4 [shape = 's32[2]{0}', space=sflag, size = 0x8, scoped, tag = 'scoped memory for tpu_custom_call.1']
    #allocation5 [shape = 'u8[131072]{0}', space=vmem, size = 0x20000, scoped, tag = 'output window, operand 0']
    %8 = vsyncpa [#allocation3], 0
    %s9 = scalar_lea.sflag [#allocation3], 1
    %10 = vsyncpa %s9, 0
    %11 = vsyncpa [#allocation4], 0
    %s12 = scalar_lea.sflag [#allocation4], 1
    %13 = vsyncpa %s12, 0
    loop: start=0, step=1, limit=4
    $region2: #{tpu_custom_call.1} parent=1 // loop_pre_header
      _
    $region3: #{tpu_custom_call.1} parent=1 // loop_header
      %s15 = sphi 0, %s19
      %p16 = scmp.ge.s32.totalorder %s15, 4
      %s22 = sphi 0, %s34
      %s23 = sphi 0, %s30
      %s24 = sphi 0, %s22
      %s25 = sphi 0, %s23
      %s26 = sphi 0, %s24
      %s27 = sphi 0, %s25
      %s35 = sphi 0, %s35
      %s37 = sphi 0, %s35
      %s38 = sphi 0, %s37
      %s52 = sphi 0, %s38
      %s56 = sphi 0, %s56
      %s58 = sphi 0, %s56
      %s59 = sphi 0, %s58
      %s73 = sphi 0, %s59
      %s81 = sphi 0, %s83
      %s84 = sphi 0, %s81
      %s85 = sphi 0, %s84
      %s101 = sphi 0, %s85
      %s109 = sphi 0, %s111
      %s112 = sphi 0, %s109
      %s113 = sphi 0, %s112
      %s129 = sphi 0, %s113
    $region4: #{tpu_custom_call.1} parent=1 // loop_header_branch
      %18 = sbr.rel (%p16) target = $region8
    $region5: #{tpu_custom_call.1} parent=1 // loop_body
      %s20 = ssub.s32 %s15, 1
      %s21 = ssub.s32 %s15, 2
      %s28 = sadd.s32 1, %s23
      %p29 = scmp.ge.s32.totalorder %s28, 1
      %s30 = scalar_select %p29, 0, %s28
      %s31 = sadd.s32 1, %s22
      %s32 = scalar_select %p29, %s31, %s22
      %p33 = scmp.ge.s32.totalorder %s32, 2
      %s34 = scalar_select %p33, 0, %s32
      %s36 = sadd.s32 %s35, 1
      %p39 = scmp.eq.s32.totalorder %s15, 1
      %p40 = scmp.ne.s32.totalorder %s35, %s37
      %p41 = scmp.eq.s32.totalorder %s15, 0
      %p42 = por %p40, %p41
      %p43 = scmp.ne.s32.totalorder %s35, %s37
      %p44 = scmp.eq.s32.totalorder %s20, 1
      %p45 = por %p43, %p44
      %p46 = scmp.ne.s32.totalorder %s37, %s38
      %p47 = scmp.eq.s32.totalorder %s20, 0
      %p48 = por %p46, %p47
      %p49 = scmp.ne.s32.totalorder %s37, %s38
      %p50 = scmp.eq.s32.totalorder %s21, 1
      %p51 = por %p49, %p50
      %p53 = scmp.ne.s32.totalorder %s38, %s52
      %p54 = scmp.eq.s32.totalorder %s21, 0
      %p55 = por %p53, %p54
      %s57 = sadd.s32 %s56, 1
      %p60 = scmp.eq.s32.totalorder %s15, 1
      %p61 = scmp.ne.s32.totalorder %s56, %s58
      %p62 = scmp.eq.s32.totalorder %s15, 0
      %p63 = por %p61, %p62
      %p64 = scmp.ne.s32.totalorder %s56, %s58
      %p65 = scmp.eq.s32.totalorder %s20, 1
      %p66 = por %p64, %p65
      %p67 = scmp.ne.s32.totalorder %s58, %s59
      %p68 = scmp.eq.s32.totalorder %s20, 0
      %p69 = por %p67, %p68
      %p70 = scmp.ne.s32.totalorder %s58, %s59
      %p71 = scmp.eq.s32.totalorder %s21, 1
      %p72 = por %p70, %p71
      %p74 = scmp.ne.s32.totalorder %s59, %s73
      %p75 = scmp.eq.s32.totalorder %s21, 0
      %p76 = por %p74, %p75
      %s77 = ssub.s32 %s22, %s34
      %s78 = ssub.s32 %s23, %s30
      %s79 = sor.u32 %s77, %s78
      %p80 = scmp.eq.s32.totalorder %s79, 0
      %s82 = sadd.s32 %s81, 1
      %s83 = scalar_select %p80, %s81, %s82
      %p86 = pneg %p80
      %p87 = scmp.eq.s32.totalorder %s15, 1
      %p88 = por %p86, %p87
      %p89 = scmp.ne.s32.totalorder %s81, %s84
      %p90 = scmp.eq.s32.totalorder %s15, 0
      %p91 = por %p89, %p90
      %p92 = scmp.ne.s32.totalorder %s81, %s84
      %p93 = scmp.eq.s32.totalorder %s20, 1
      %p94 = por %p92, %p93
      %p95 = scmp.ne.s32.totalorder %s84, %s85
      %p96 = scmp.eq.s32.totalorder %s20, 0
      %p97 = por %p95, %p96
      %p98 = scmp.ne.s32.totalorder %s84, %s85
      %p99 = scmp.eq.s32.totalorder %s21, 1
      %p100 = por %p98, %p99
      %p102 = scmp.ne.s32.totalorder %s85, %s101
      %p103 = scmp.eq.s32.totalorder %s21, 0
      %p104 = por %p102, %p103
      %s105 = ssub.s32 %s22, %s34
      %s106 = ssub.s32 %s23, %s30
      %s107 = sor.u32 %s105, %s106
      %p108 = scmp.eq.s32.totalorder %s107, 0
      %s110 = sadd.s32 %s109, 1
      %s111 = scalar_select %p108, %s109, %s110
      %p114 = pneg %p108
      %p115 = scmp.eq.s32.totalorder %s15, 1
      %p116 = por %p114, %p115
      %p117 = scmp.ne.s32.totalorder %s109, %s112
      %p118 = scmp.eq.s32.totalorder %s15, 0
      %p119 = por %p117, %p118
      %p120 = scmp.ne.s32.totalorder %s109, %s112
      %p121 = scmp.eq.s32.totalorder %s20, 1
      %p122 = por %p120, %p121
      %p123 = scmp.ne.s32.totalorder %s112, %s113
      %p124 = scmp.eq.s32.totalorder %s20, 0
      %p125 = por %p123, %p124
      %p126 = scmp.ne.s32.totalorder %s112, %s113
      %p127 = scmp.eq.s32.totalorder %s21, 1
      %p128 = por %p126, %p127
      %p130 = scmp.ne.s32.totalorder %s113, %s129
      %p131 = scmp.eq.s32.totalorder %s21, 0
      %p132 = por %p130, %p131
      %p133 = scmp.le.s32.totalorder 1, %s15
      %p134 = scmp.lt.s32.totalorder %s15, 3
      %p135 = pnand %p133, %p134
      %p136 = pneg %p135
      // Predicated region
      $region9: #{tpu_custom_call.1} parent=5 // pred_check
        _
      $region10: #{tpu_custom_call.1} parent=5 // pred_check_branch
        %138 = sbr.rel (%p135) target = $region12
      $region11: #{tpu_custom_call.1} parent=5 // pred_region
        %s139 = ssub.s32 %s15, 1
        // Predicated region
        $region13: #{tpu_custom_call.1} parent=11 // pred_check
          %p140 = pneg %p48
        $region14: #{tpu_custom_call.1} parent=11 // pred_check_branch
          %142 = sbr.rel (%p140) target = $region16
        $region15: #{tpu_custom_call.1} parent=11 // pred_region
          _
        $region16: #{tpu_custom_call.1} parent=11 // pred_fallthru
          _
        // Predicated region
        $region17: #{tpu_custom_call.1} parent=11 // pred_check
          %p143 = pneg %p69
        $region18: #{tpu_custom_call.1} parent=11 // pred_check_branch
          %145 = sbr.rel (%p143) target = $region20
        $region19: #{tpu_custom_call.1} parent=11 // pred_region
          _
        $region20: #{tpu_custom_call.1} parent=11 // pred_fallthru
          _
      $region12: #{tpu_custom_call.1} parent=5 // pred_fallthru
        _
      %p146 = scmp.lt.s32.totalorder %s15, 2
      // Predicated region
      $region21: #{tpu_custom_call.1} parent=5 // pred_check
        %p147 = pneg %p146
      $region22: #{tpu_custom_call.1} parent=5 // pred_check_branch
        %149 = sbr.rel (%p147) target = $region24
      $region23: #{tpu_custom_call.1} parent=5 // pred_region
        // Predicated region
        $region25: #{tpu_custom_call.1} parent=23 // pred_check
          %p150 = pneg %p91
        $region26: #{tpu_custom_call.1} parent=23 // pred_check_branch
          %152 = sbr.rel (%p150) target = $region28
        $region27: #{tpu_custom_call.1} parent=23 // pred_region
          %s153 = sand.u32 %s81, 1
          %s154 = scalar_lea.sflag [#allocation3], %s153
          %s155 = sand.u32 %s81, 1
          %s156 = smul.addr %s155, 64
          %s157 = scalar_lea.vmem [#allocation2], %s156
          %s158 = smul.u32 4, %s23
          %s160 = ssub.s32 1024, 1024
          %161 = vsyncadd %s154, %s160
          %s162 = smul.addr %s158, 2
          %s163 = smul.addr %s22, 8
          %s164 = sadd.s32 %s162, %s163
          %s165 = smul.addr %s164, 128
          %s166 = scalar_lea.hbm %s2, %s165
          %s167 = sshll.u32 %s157, 4
          %s168 = int_to_ptr.vmem [resolvable:$true] %s167
          %173 = dma.hbm_to_vmem [thread:$0]  %s166, 1024, %s168, %s154, 128, 128, 8
        $region28: #{tpu_custom_call.1} parent=23 // pred_fallthru
          _
      $region24: #{tpu_custom_call.1} parent=5 // pred_fallthru
        _
      %p174 = scmp.le.s32.totalorder 1, %s15
      %p175 = scmp.lt.s32.totalorder %s15, 3
      %p176 = pnand %p174, %p175
      %p177 = pneg %p176
      // Predicated region
      $region29: #{tpu_custom_call.1} parent=5 // pred_check
        _
      $region30: #{tpu_custom_call.1} parent=5 // pred_check_branch
        %179 = sbr.rel (%p176) target = $region32
      $region31: #{tpu_custom_call.1} parent=5 // pred_region
        %s180 = ssub.s32 %s15, 1
        %s181 = sand.u32 %s84, 1
        %s182 = scalar_lea.sflag [#allocation3], %s181
        %s183 = sand.u32 %s84, 1
        %s184 = smul.addr %s183, 64
        %s185 = scalar_lea.vmem [#allocation2], %s184
        // Predicated region
        $region33: #{tpu_custom_call.1} parent=31 // pred_check
          %p186 = pneg %p97
        $region34: #{tpu_custom_call.1} parent=31 // pred_check_branch
          %188 = sbr.rel (%p186) target = $region36
        $region35: #{tpu_custom_call.1} parent=31 // pred_region
          %189 = dma.done %s182, 1024
        $region36: #{tpu_custom_call.1} parent=31 // pred_fallthru
          _
        %p190 = pneg %p48
        %p191 = pneg %p45
        %p192 = pneg %p69
        %p193 = pneg %p66
        %s194 = sand.u32 %s84, 1
        %s195 = scalar_lea.sflag [#allocation3], %s194
        %s196 = sand.u32 %s84, 1
        %s197 = smul.addr %s196, 64
        %s198 = scalar_lea.vmem [#allocation2], %s197
        %p199 = pneg %p97
        %p200 = pneg %p94
        %p201 = pneg %p125
        %p202 = pneg %p122
        %s203 = sand.u32 %s112, 1
        %s204 = scalar_lea.sflag [#allocation4], %s203
        %s205 = sand.u32 %s112, 1
        %s206 = smul.addr %s205, 128
        %s207 = scalar_lea.vmem [#allocation5], %s206
        %s208 = smul.u32 4, %s25
        %s209 = smul.u32 4, %s25
        %v210 = vld [vmem:[%s0] sm:$0xff]
        %v211 = vld [vmem:[%s0 + $0x8] sm:$0xff]
        %v212 = vld [vmem:[%s0 + $0x10] sm:$0xff]
        %v213 = vld [vmem:[%s0 + $0x18] sm:$0xff]
        %v214 = vld [vmem:[%s1] sm:$0xff]
        %v215 = vld [vmem:[%s1 + $0x8] sm:$0xff]
        %v216 = vld [vmem:[%s185] sm:$0xff]
        %v217 = vld [vmem:[%s185 + $0x8] sm:$0xff]
        %vm218 = vcmask 130048
        %v220 = vsel %vm218, %v210, 0
        %v223 = vsel %vm218, %v211, 0
        %v226 = vsel %vm218, %v212, 0
        %v229 = vsel %vm218, %v213, 0
        %231 = vmatprep.subr.mxu0 0.0
        %232 = vmatpush1.msra.mxu0 0.0
        %233 = vmatprep.subr.mxu0 0.0
        %234 = vmatpush1.msra.mxu0 0.0
        %235 = vmatprep.subr.mxu0 0.0
        %236 = vmatpush1.msra.mxu0 0.0
        %237 = vmatprep.subr.mxu0 0.0
        %238 = vmatpush1.msra.mxu0 0.0
        %239 = vmatprep.subr.mxu0 0.0
        %240 = vmatpush1.msra.mxu0 0.0
        %241 = vmatprep.subr.mxu0 0.0
        %242 = vmatpush1.msra.mxu0 0.0
        %243 = vmatprep.subr.mxu0 0.0
        %244 = vmatpush1.msra.mxu0 0.0
        %245 = vmatprep.subr.mxu0 0.0
        %246 = vmatpush1.msra.mxu0 0.0
        %247 = vmatprep.subr.mxu0 0.0
        %248 = vmatpush1.msra.mxu0 0.0
        %249 = vmatprep.subr.mxu0 0.0
        %250 = vmatpush1.msra.mxu0 0.0
        %251 = vmatprep.subr.mxu0 0.0
        %252 = vmatpush1.msra.mxu0 0.0
        %253 = vmatprep.subr.mxu0 0.0
        %254 = vmatpush1.msra.mxu0 0.0
        %255 = vmatprep.subr.mxu0 0.0
        %256 = vmatpush1.msra.mxu0 0.0
        %257 = vmatprep.subr.mxu0 0.0
        %258 = vmatpush1.msra.mxu0 0.0
        %259 = vmatprep.subr.mxu0 0.0
        %260 = vmatpush1.msra.mxu0 %v217
        %261 = vmatprep.subr.mxu0 0.0
        %262 = vmatpush1.msra.mxu0 %v216
        %263 = vmatprep.subr.mxu0 0.0
        %264 = vmatpush2.msra.mxu0 0.0
        %265 = vmatprep.subr.mxu0 0.0
        %266 = vmatpush2.msra.mxu0 0.0
        %267 = vmatprep.subr.mxu0 0.0
        %268 = vmatpush2.msra.mxu0 0.0
        %269 = vmatprep.subr.mxu0 0.0
        %270 = vmatpush2.msra.mxu0 0.0
        %271 = vmatprep.subr.mxu0 0.0
        %272 = vmatpush2.msra.mxu0 0.0
        %273 = vmatprep.subr.mxu0 0.0
        %274 = vmatpush2.msra.mxu0 0.0
        %275 = vmatprep.subr.mxu0 0.0
        %276 = vmatpush2.msra.mxu0 0.0
        %277 = vmatprep.subr.mxu0 0.0
        %278 = vmatpush2.msra.mxu0 0.0
        %279 = vmatprep.subr.mxu0 0.0
        %280 = vmatpush2.msra.mxu0 0.0
        %281 = vmatprep.subr.mxu0 0.0
        %282 = vmatpush2.msra.mxu0 0.0
        %283 = vmatprep.subr.mxu0 0.0
        %284 = vmatpush2.msra.mxu0 0.0
        %285 = vmatprep.subr.mxu0 0.0
        %286 = vmatpush2.msra.mxu0 0.0
        %287 = vmatprep.subr.mxu0 0.0
        %288 = vmatpush2.msra.mxu0 0.0
        %289 = vmatprep.subr.mxu0 0.0
        %290 = vmatpush2.msra.mxu0 0.0
        %291 = vmatprep.subr.mxu0 0.0
        %292 = vmatpush2.msra.mxu0 0.0
        %293 = vmatprep.subr.mxu0 0.0
        %294 = vmatpush2.msra.mxu0 0.0
        %295 = vmatprep.mubr.f32.mxu0 0.0
        %296 = vmatmul.mubr.f32.gmra.mxu0 %v220
        %v297 = vpop.f32.mrf.mxu0
        %v298 = vadd.f32 0.0, %v297
        %v299 = vpop.f32.mrf.mxu0
        %300 = vmatprep.mubr.f32.mxu0 0.0
        %301 = vmatmul.mubr.f32.gmra.mxu0 %v223
        %v302 = vpop.f32.mrf.mxu0
        %v303 = vadd.f32 0.0, %v302
        %v304 = vpop.f32.mrf.mxu0
        %305 = vmatprep.mubr.f32.mxu0 0.0
        %306 = vmatmul.mubr.f32.gmra.mxu0 %v226
        %v307 = vpop.f32.mrf.mxu0
        %v308 = vadd.f32 0.0, %v307
        %v309 = vpop.f32.mrf.mxu0
        %310 = vmatprep.mubr.f32.mxu0 0.0
        %311 = vmatmul.mubr.f32.gmra.mxu0 %v229
        %v312 = vpop.f32.mrf.mxu0
        %v313 = vadd.f32 0.0, %v312
        %v314 = vpop.f32.mrf.mxu0
        %315 = vdwg.mxu0
        %v317 = vsel %vm218, %v298, 0
        %v320 = vsel %vm218, %v303, 0
        %v323 = vsel %vm218, %v308, 0
        %v326 = vsel %vm218, %v313, 0
        %328 = vmatprep.subr.mxu0 0.0
        %329 = vmatpush1.msra.mxu0 0.0
        %330 = vmatprep.subr.mxu0 0.0
        %331 = vmatpush1.msra.mxu0 0.0
        %332 = vmatprep.subr.mxu0 0.0
        %333 = vmatpush1.msra.mxu0 0.0
        %334 = vmatprep.subr.mxu0 0.0
        %335 = vmatpush1.msra.mxu0 0.0
        %336 = vmatprep.subr.mxu0 0.0
        %337 = vmatpush1.msra.mxu0 0.0
        %338 = vmatprep.subr.mxu0 0.0
        %339 = vmatpush1.msra.mxu0 0.0
        %340 = vmatprep.subr.mxu0 0.0
        %341 = vmatpush1.msra.mxu0 0.0
        %342 = vmatprep.subr.mxu0 0.0
        %343 = vmatpush1.msra.mxu0 0.0
        %344 = vmatprep.subr.mxu0 0.0
        %345 = vmatpush1.msra.mxu0 0.0
        %346 = vmatprep.subr.mxu0 0.0
        %347 = vmatpush1.msra.mxu0 0.0
        %348 = vmatprep.subr.mxu0 0.0
        %349 = vmatpush1.msra.mxu0 0.0
        %350 = vmatprep.subr.mxu0 0.0
        %351 = vmatpush1.msra.mxu0 0.0
        %352 = vmatprep.subr.mxu0 0.0
        %353 = vmatpush1.msra.mxu0 0.0
        %354 = vmatprep.subr.mxu0 0.0
        %355 = vmatpush1.msra.mxu0 0.0
        %356 = vmatprep.subr.mxu0 0.0
        %357 = vmatpush1.msra.mxu0 %v215
        %358 = vmatprep.subr.mxu0 0.0
        %359 = vmatpush1.msra.mxu0 %v214
        %360 = vmatprep.subr.mxu0 0.0
        %361 = vmatpush2.msra.mxu0 0.0
        %362 = vmatprep.subr.mxu0 0.0
        %363 = vmatpush2.msra.mxu0 0.0
        %364 = vmatprep.subr.mxu0 0.0
        %365 = vmatpush2.msra.mxu0 0.0
        %366 = vmatprep.subr.mxu0 0.0
        %367 = vmatpush2.msra.mxu0 0.0
        %368 = vmatprep.subr.mxu0 0.0
        %369 = vmatpush2.msra.mxu0 0.0
        %370 = vmatprep.subr.mxu0 0.0
        %371 = vmatpush2.msra.mxu0 0.0
        %372 = vmatprep.subr.mxu0 0.0
        %373 = vmatpush2.msra.mxu0 0.0
        %374 = vmatprep.subr.mxu0 0.0
        %375 = vmatpush2.msra.mxu0 0.0
        %376 = vmatprep.subr.mxu0 0.0
        %377 = vmatpush2.msra.mxu0 0.0
        %378 = vmatprep.subr.mxu0 0.0
        %379 = vmatpush2.msra.mxu0 0.0
        %380 = vmatprep.subr.mxu0 0.0
        %381 = vmatpush2.msra.mxu0 0.0
        %382 = vmatprep.subr.mxu0 0.0
        %383 = vmatpush2.msra.mxu0 0.0
        %384 = vmatprep.subr.mxu0 0.0
        %385 = vmatpush2.msra.mxu0 0.0
        %386 = vmatprep.subr.mxu0 0.0
        %387 = vmatpush2.msra.mxu0 0.0
        %388 = vmatprep.subr.mxu0 0.0
        %389 = vmatpush2.msra.mxu0 0.0
        %390 = vmatprep.subr.mxu0 0.0
        %391 = vmatpush2.msra.mxu0 0.0
        %392 = vmatprep.mubr.f32.mxu0 0.0
        %393 = vmatmul.mubr.f32.gmra.mxu0 %v317
        %v394 = vpop.f32.mrf.mxu0
        %v395 = vadd.f32 0.0, %v394
        %v396 = vpop.f32.mrf.mxu0
        %397 = vmatprep.mubr.f32.mxu0 0.0
        %398 = vmatmul.mubr.f32.gmra.mxu0 %v320
        %v399 = vpop.f32.mrf.mxu0
        %v400 = vadd.f32 0.0, %v399
        %v401 = vpop.f32.mrf.mxu0
        %402 = vmatprep.mubr.f32.mxu0 0.0
        %403 = vmatmul.mubr.f32.gmra.mxu0 %v323
        %v404 = vpop.f32.mrf.mxu0
        %v405 = vadd.f32 0.0, %v404
        %v406 = vpop.f32.mrf.mxu0
        %407 = vmatprep.mubr.f32.mxu0 0.0
        %408 = vmatmul.mubr.f32.gmra.mxu0 %v326
        %v409 = vpop.f32.mrf.mxu0
        %v410 = vadd.f32 0.0, %v409
        %v411 = vpop.f32.mrf.mxu0
        %412 = vdwg.mxu0
        %vm413 = vcmask 261120
        %414 = vst.msk [vmem:[%s207] sm:$0xff] %vm413, %v395
        %415 = vst.msk [vmem:[%s207 + $0x8] sm:$0xff] %vm413, %v400
        %416 = vst.msk [vmem:[%s207 + $0x10] sm:$0xff] %vm413, %v405
        %417 = vst.msk [vmem:[%s207 + $0x18] sm:$0xff] %vm413, %v410
        %s418 = scalar_lea.vmem %s185, 16 [#allocation2]
        %v419 = vld [vmem:[%s418] sm:$0xff]
        %v420 = vld [vmem:[%s418 + $0x8] sm:$0xff]
        %421 = vmatprep.subr.mxu0 0.0
        %422 = vmatpush1.msra.mxu0 0.0
        %423 = vmatprep.subr.mxu0 0.0
        %424 = vmatpush1.msra.mxu0 0.0
        %425 = vmatprep.subr.mxu0 0.0
        %426 = vmatpush1.msra.mxu0 0.0
        %427 = vmatprep.subr.mxu0 0.0
        %428 = vmatpush1.msra.mxu0 0.0
        %429 = vmatprep.subr.mxu0 0.0
        %430 = vmatpush1.msra.mxu0 0.0
        %431 = vmatprep.subr.mxu0 0.0
        %432 = vmatpush1.msra.mxu0 0.0
        %433 = vmatprep.subr.mxu0 0.0
        %434 = vmatpush1.msra.mxu0 0.0
        %435 = vmatprep.subr.mxu0 0.0
        %436 = vmatpush1.msra.mxu0 0.0
        %437 = vmatprep.subr.mxu0 0.0
        %438 = vmatpush1.msra.mxu0 0.0
        %439 = vmatprep.subr.mxu0 0.0
        %440 = vmatpush1.msra.mxu0 0.0
        %441 = vmatprep.subr.mxu0 0.0
        %442 = vmatpush1.msra.mxu0 0.0
        %443 = vmatprep.subr.mxu0 0.0
        %444 = vmatpush1.msra.mxu0 0.0
        %445 = vmatprep.subr.mxu0 0.0
        %446 = vmatpush1.msra.mxu0 0.0
        %447 = vmatprep.subr.mxu0 0.0
        %448 = vmatpush1.msra.mxu0 0.0
        %449 = vmatprep.subr.mxu0 0.0
        %450 = vmatpush1.msra.mxu0 %v420
        %451 = vmatprep.subr.mxu0 0.0
        %452 = vmatpush1.msra.mxu0 %v419
        %453 = vmatprep.subr.mxu0 0.0
        %454 = vmatpush2.msra.mxu0 0.0
        %455 = vmatprep.subr.mxu0 0.0
        %456 = vmatpush2.msra.mxu0 0.0
        %457 = vmatprep.subr.mxu0 0.0
        %458 = vmatpush2.msra.mxu0 0.0
        %459 = vmatprep.subr.mxu0 0.0
        %460 = vmatpush2.msra.mxu0 0.0
        %461 = vmatprep.subr.mxu0 0.0
        %462 = vmatpush2.msra.mxu0 0.0
        %463 = vmatprep.subr.mxu0 0.0
        %464 = vmatpush2.msra.mxu0 0.0
        %465 = vmatprep.subr.mxu0 0.0
        %466 = vmatpush2.msra.mxu0 0.0
        %467 = vmatprep.subr.mxu0 0.0
        %468 = vmatpush2.msra.mxu0 0.0
        %469 = vmatprep.subr.mxu0 0.0
        %470 = vmatpush2.msra.mxu0 0.0
        %471 = vmatprep.subr.mxu0 0.0
        %472 = vmatpush2.msra.mxu0 0.0
        %473 = vmatprep.subr.mxu0 0.0
        %474 = vmatpush2.msra.mxu0 0.0
        %475 = vmatprep.subr.mxu0 0.0
        %476 = vmatpush2.msra.mxu0 0.0
        %477 = vmatprep.subr.mxu0 0.0
        %478 = vmatpush2.msra.mxu0 0.0
        %479 = vmatprep.subr.mxu0 0.0
        %480 = vmatpush2.msra.mxu0 0.0
        %481 = vmatprep.subr.mxu0 0.0
        %482 = vmatpush2.msra.mxu0 0.0
        %483 = vmatprep.subr.mxu0 0.0
        %484 = vmatpush2.msra.mxu0 0.0
        %485 = vmatprep.mubr.f32.mxu0 0.0
        %486 = vmatmul.mubr.f32.gmra.mxu0 %v220
        %v487 = vpop.f32.mrf.mxu0
        %v488 = vadd.f32 0.0, %v487
        %v489 = vpop.f32.mrf.mxu0
        %490 = vmatprep.mubr.f32.mxu0 0.0
        %491 = vmatmul.mubr.f32.gmra.mxu0 %v223
        %v492 = vpop.f32.mrf.mxu0
        %v493 = vadd.f32 0.0, %v492
        %v494 = vpop.f32.mrf.mxu0
        %495 = vmatprep.mubr.f32.mxu0 0.0
        %496 = vmatmul.mubr.f32.gmra.mxu0 %v226
        %v497 = vpop.f32.mrf.mxu0
        %v498 = vadd.f32 0.0, %v497
        %v499 = vpop.f32.mrf.mxu0
        %500 = vmatprep.mubr.f32.mxu0 0.0
        %501 = vmatmul.mubr.f32.gmra.mxu0 %v229
        %v502 = vpop.f32.mrf.mxu0
        %v503 = vadd.f32 0.0, %v502
        %v504 = vpop.f32.mrf.mxu0
        %505 = vdwg.mxu0
        %v507 = vsel %vm218, %v488, 0
        %v510 = vsel %vm218, %v493, 0
        %v513 = vsel %vm218, %v498, 0
        %v516 = vsel %vm218, %v503, 0
        %518 = vmatprep.subr.mxu0 0.0
        %519 = vmatpush1.msra.mxu0 0.0
        %520 = vmatprep.subr.mxu0 0.0
        %521 = vmatpush1.msra.mxu0 0.0
        %522 = vmatprep.subr.mxu0 0.0
        %523 = vmatpush1.msra.mxu0 0.0
        %524 = vmatprep.subr.mxu0 0.0
        %525 = vmatpush1.msra.mxu0 0.0
        %526 = vmatprep.subr.mxu0 0.0
        %527 = vmatpush1.msra.mxu0 0.0
        %528 = vmatprep.subr.mxu0 0.0
        %529 = vmatpush1.msra.mxu0 0.0
        %530 = vmatprep.subr.mxu0 0.0
        %531 = vmatpush1.msra.mxu0 0.0
        %532 = vmatprep.subr.mxu0 0.0
        %533 = vmatpush1.msra.mxu0 0.0
        %534 = vmatprep.subr.mxu0 0.0
        %535 = vmatpush1.msra.mxu0 0.0
        %536 = vmatprep.subr.mxu0 0.0
        %537 = vmatpush1.msra.mxu0 0.0
        %538 = vmatprep.subr.mxu0 0.0
        %539 = vmatpush1.msra.mxu0 0.0
        %540 = vmatprep.subr.mxu0 0.0
        %541 = vmatpush1.msra.mxu0 0.0
        %542 = vmatprep.subr.mxu0 0.0
        %543 = vmatpush1.msra.mxu0 0.0
        %544 = vmatprep.subr.mxu0 0.0
        %545 = vmatpush1.msra.mxu0 0.0
        %546 = vmatprep.subr.mxu0 0.0
        %547 = vmatpush1.msra.mxu0 %v215
        %548 = vmatprep.subr.mxu0 0.0
        %549 = vmatpush1.msra.mxu0 %v214
        %550 = vmatprep.subr.mxu0 0.0
        %551 = vmatpush2.msra.mxu0 0.0
        %552 = vmatprep.subr.mxu0 0.0
        %553 = vmatpush2.msra.mxu0 0.0
        %554 = vmatprep.subr.mxu0 0.0
        %555 = vmatpush2.msra.mxu0 0.0
        %556 = vmatprep.subr.mxu0 0.0
        %557 = vmatpush2.msra.mxu0 0.0
        %558 = vmatprep.subr.mxu0 0.0
        %559 = vmatpush2.msra.mxu0 0.0
        %560 = vmatprep.subr.mxu0 0.0
        %561 = vmatpush2.msra.mxu0 0.0
        %562 = vmatprep.subr.mxu0 0.0
        %563 = vmatpush2.msra.mxu0 0.0
        %564 = vmatprep.subr.mxu0 0.0
        %565 = vmatpush2.msra.mxu0 0.0
        %566 = vmatprep.subr.mxu0 0.0
        %567 = vmatpush2.msra.mxu0 0.0
        %568 = vmatprep.subr.mxu0 0.0
        %569 = vmatpush2.msra.mxu0 0.0
        %570 = vmatprep.subr.mxu0 0.0
        %571 = vmatpush2.msra.mxu0 0.0
        %572 = vmatprep.subr.mxu0 0.0
        %573 = vmatpush2.msra.mxu0 0.0
        %574 = vmatprep.subr.mxu0 0.0
        %575 = vmatpush2.msra.mxu0 0.0
        %576 = vmatprep.subr.mxu0 0.0
        %577 = vmatpush2.msra.mxu0 0.0
        %578 = vmatprep.subr.mxu0 0.0
        %579 = vmatpush2.msra.mxu0 0.0
        %580 = vmatprep.subr.mxu0 0.0
        %581 = vmatpush2.msra.mxu0 0.0
        %582 = vmatprep.mubr.f32.mxu0 0.0
        %583 = vmatmul.mubr.f32.gmra.mxu0 %v507
        %v584 = vpop.f32.mrf.mxu0
        %v585 = vadd.f32 0.0, %v584
        %v586 = vpop.f32.mrf.mxu0
        %587 = vmatprep.mubr.f32.mxu0 0.0
        %588 = vmatmul.mubr.f32.gmra.mxu0 %v510
        %v589 = vpop.f32.mrf.mxu0
        %v590 = vadd.f32 0.0, %v589
        %v591 = vpop.f32.mrf.mxu0
        %592 = vmatprep.mubr.f32.mxu0 0.0
        %593 = vmatmul.mubr.f32.gmra.mxu0 %v513
        %v594 = vpop.f32.mrf.mxu0
        %v595 = vadd.f32 0.0, %v594
        %v596 = vpop.f32.mrf.mxu0
        %597 = vmatprep.mubr.f32.mxu0 0.0
        %598 = vmatmul.mubr.f32.gmra.mxu0 %v516
        %v599 = vpop.f32.mrf.mxu0
        %v600 = vadd.f32 0.0, %v599
        %v601 = vpop.f32.mrf.mxu0
        %602 = vdwg.mxu0
        %s603 = scalar_lea.vmem %s207, 32 [#allocation5]
        %604 = vst.msk [vmem:[%s603] sm:$0xff] %vm413, %v585
        %605 = vst.msk [vmem:[%s603 + $0x8] sm:$0xff] %vm413, %v590
        %606 = vst.msk [vmem:[%s603 + $0x10] sm:$0xff] %vm413, %v595
        %607 = vst.msk [vmem:[%s603 + $0x18] sm:$0xff] %vm413, %v600
        %s608 = scalar_lea.vmem %s185, 32 [#allocation2]
        %v609 = vld [vmem:[%s608] sm:$0xff]
        %v610 = vld [vmem:[%s608 + $0x8] sm:$0xff]
        %611 = vmatprep.subr.mxu0 0.0
        %612 = vmatpush1.msra.mxu0 0.0
        %613 = vmatprep.subr.mxu0 0.0
        %614 = vmatpush1.msra.mxu0 0.0
        %615 = vmatprep.subr.mxu0 0.0
        %616 = vmatpush1.msra.mxu0 0.0
        %617 = vmatprep.subr.mxu0 0.0
        %618 = vmatpush1.msra.mxu0 0.0
        %619 = vmatprep.subr.mxu0 0.0
        %620 = vmatpush1.msra.mxu0 0.0
        %621 = vmatprep.subr.mxu0 0.0
        %622 = vmatpush1.msra.mxu0 0.0
        %623 = vmatprep.subr.mxu0 0.0
        %624 = vmatpush1.msra.mxu0 0.0
        %625 = vmatprep.subr.mxu0 0.0
        %626 = vmatpush1.msra.mxu0 0.0
        %627 = vmatprep.subr.mxu0 0.0
        %628 = vmatpush1.msra.mxu0 0.0
        %629 = vmatprep.subr.mxu0 0.0
        %630 = vmatpush1.msra.mxu0 0.0
        %631 = vmatprep.subr.mxu0 0.0
        %632 = vmatpush1.msra.mxu0 0.0
        %633 = vmatprep.subr.mxu0 0.0
        %634 = vmatpush1.msra.mxu0 0.0
        %635 = vmatprep.subr.mxu0 0.0
        %636 = vmatpush1.msra.mxu0 0.0
        %637 = vmatprep.subr.mxu0 0.0
        %638 = vmatpush1.msra.mxu0 0.0
        %639 = vmatprep.subr.mxu0 0.0
        %640 = vmatpush1.msra.mxu0 %v610
        %641 = vmatprep.subr.mxu0 0.0
        %642 = vmatpush1.msra.mxu0 %v609
        %643 = vmatprep.subr.mxu0 0.0
        %644 = vmatpush2.msra.mxu0 0.0
        %645 = vmatprep.subr.mxu0 0.0
        %646 = vmatpush2.msra.mxu0 0.0
        %647 = vmatprep.subr.mxu0 0.0
        %648 = vmatpush2.msra.mxu0 0.0
        %649 = vmatprep.subr.mxu0 0.0
        %650 = vmatpush2.msra.mxu0 0.0
        %651 = vmatprep.subr.mxu0 0.0
        %652 = vmatpush2.msra.mxu0 0.0
        %653 = vmatprep.subr.mxu0 0.0
        %654 = vmatpush2.msra.mxu0 0.0
        %655 = vmatprep.subr.mxu0 0.0
        %656 = vmatpush2.msra.mxu0 0.0
        %657 = vmatprep.subr.mxu0 0.0
        %658 = vmatpush2.msra.mxu0 0.0
        %659 = vmatprep.subr.mxu0 0.0
        %660 = vmatpush2.msra.mxu0 0.0
        %661 = vmatprep.subr.mxu0 0.0
        %662 = vmatpush2.msra.mxu0 0.0
        %663 = vmatprep.subr.mxu0 0.0
        %664 = vmatpush2.msra.mxu0 0.0
        %665 = vmatprep.subr.mxu0 0.0
        %666 = vmatpush2.msra.mxu0 0.0
        %667 = vmatprep.subr.mxu0 0.0
        %668 = vmatpush2.msra.mxu0 0.0
        %669 = vmatprep.subr.mxu0 0.0
        %670 = vmatpush2.msra.mxu0 0.0
        %671 = vmatprep.subr.mxu0 0.0
        %672 = vmatpush2.msra.mxu0 0.0
        %673 = vmatprep.subr.mxu0 0.0
        %674 = vmatpush2.msra.mxu0 0.0
        %675 = vmatprep.mubr.f32.mxu0 0.0
        %676 = vmatmul.mubr.f32.gmra.mxu0 %v220
        %v677 = vpop.f32.mrf.mxu0
        %v678 = vadd.f32 0.0, %v677
        %v679 = vpop.f32.mrf.mxu0
        %680 = vmatprep.mubr.f32.mxu0 0.0
        %681 = vmatmul.mubr.f32.gmra.mxu0 %v223
        %v682 = vpop.f32.mrf.mxu0
        %v683 = vadd.f32 0.0, %v682
        %v684 = vpop.f32.mrf.mxu0
        %685 = vmatprep.mubr.f32.mxu0 0.0
        %686 = vmatmul.mubr.f32.gmra.mxu0 %v226
        %v687 = vpop.f32.mrf.mxu0
        %v688 = vadd.f32 0.0, %v687
        %v689 = vpop.f32.mrf.mxu0
        %690 = vmatprep.mubr.f32.mxu0 0.0
        %691 = vmatmul.mubr.f32.gmra.mxu0 %v229
        %v692 = vpop.f32.mrf.mxu0
        %v693 = vadd.f32 0.0, %v692
        %v694 = vpop.f32.mrf.mxu0
        %695 = vdwg.mxu0
        %v697 = vsel %vm218, %v678, 0
        %v700 = vsel %vm218, %v683, 0
        %v703 = vsel %vm218, %v688, 0
        %v706 = vsel %vm218, %v693, 0
        %708 = vmatprep.subr.mxu0 0.0
        %709 = vmatpush1.msra.mxu0 0.0
        %710 = vmatprep.subr.mxu0 0.0
        %711 = vmatpush1.msra.mxu0 0.0
        %712 = vmatprep.subr.mxu0 0.0
        %713 = vmatpush1.msra.mxu0 0.0
        %714 = vmatprep.subr.mxu0 0.0
        %715 = vmatpush1.msra.mxu0 0.0
        %716 = vmatprep.subr.mxu0 0.0
        %717 = vmatpush1.msra.mxu0 0.0
        %718 = vmatprep.subr.mxu0 0.0
        %719 = vmatpush1.msra.mxu0 0.0
        %720 = vmatprep.subr.mxu0 0.0
        %721 = vmatpush1.msra.mxu0 0.0
        %722 = vmatprep.subr.mxu0 0.0
        %723 = vmatpush1.msra.mxu0 0.0
        %724 = vmatprep.subr.mxu0 0.0
        %725 = vmatpush1.msra.mxu0 0.0
        %726 = vmatprep.subr.mxu0 0.0
        %727 = vmatpush1.msra.mxu0 0.0
        %728 = vmatprep.subr.mxu0 0.0
        %729 = vmatpush1.msra.mxu0 0.0
        %730 = vmatprep.subr.mxu0 0.0
        %731 = vmatpush1.msra.mxu0 0.0
        %732 = vmatprep.subr.mxu0 0.0
        %733 = vmatpush1.msra.mxu0 0.0
        %734 = vmatprep.subr.mxu0 0.0
        %735 = vmatpush1.msra.mxu0 0.0
        %736 = vmatprep.subr.mxu0 0.0
        %737 = vmatpush1.msra.mxu0 %v215
        %738 = vmatprep.subr.mxu0 0.0
        %739 = vmatpush1.msra.mxu0 %v214
        %740 = vmatprep.subr.mxu0 0.0
        %741 = vmatpush2.msra.mxu0 0.0
        %742 = vmatprep.subr.mxu0 0.0
        %743 = vmatpush2.msra.mxu0 0.0
        %744 = vmatprep.subr.mxu0 0.0
        %745 = vmatpush2.msra.mxu0 0.0
        %746 = vmatprep.subr.mxu0 0.0
        %747 = vmatpush2.msra.mxu0 0.0
        %748 = vmatprep.subr.mxu0 0.0
        %749 = vmatpush2.msra.mxu0 0.0
        %750 = vmatprep.subr.mxu0 0.0
        %751 = vmatpush2.msra.mxu0 0.0
        %752 = vmatprep.subr.mxu0 0.0
        %753 = vmatpush2.msra.mxu0 0.0
        %754 = vmatprep.subr.mxu0 0.0
        %755 = vmatpush2.msra.mxu0 0.0
        %756 = vmatprep.subr.mxu0 0.0
        %757 = vmatpush2.msra.mxu0 0.0
        %758 = vmatprep.subr.mxu0 0.0
        %759 = vmatpush2.msra.mxu0 0.0
        %760 = vmatprep.subr.mxu0 0.0
        %761 = vmatpush2.msra.mxu0 0.0
        %762 = vmatprep.subr.mxu0 0.0
        %763 = vmatpush2.msra.mxu0 0.0
        %764 = vmatprep.subr.mxu0 0.0
        %765 = vmatpush2.msra.mxu0 0.0
        %766 = vmatprep.subr.mxu0 0.0
        %767 = vmatpush2.msra.mxu0 0.0
        %768 = vmatprep.subr.mxu0 0.0
        %769 = vmatpush2.msra.mxu0 0.0
        %770 = vmatprep.subr.mxu0 0.0
        %771 = vmatpush2.msra.mxu0 0.0
        %772 = vmatprep.mubr.f32.mxu0 0.0
        %773 = vmatmul.mubr.f32.gmra.mxu0 %v697
        %v774 = vpop.f32.mrf.mxu0
        %v775 = vadd.f32 0.0, %v774
        %v776 = vpop.f32.mrf.mxu0
        %777 = vmatprep.mubr.f32.mxu0 0.0
        %778 = vmatmul.mubr.f32.gmra.mxu0 %v700
        %v779 = vpop.f32.mrf.mxu0
        %v780 = vadd.f32 0.0, %v779
        %v781 = vpop.f32.mrf.mxu0
        %782 = vmatprep.mubr.f32.mxu0 0.0
        %783 = vmatmul.mubr.f32.gmra.mxu0 %v703
        %v784 = vpop.f32.mrf.mxu0
        %v785 = vadd.f32 0.0, %v784
        %v786 = vpop.f32.mrf.mxu0
        %787 = vmatprep.mubr.f32.mxu0 0.0
        %788 = vmatmul.mubr.f32.gmra.mxu0 %v706
        %v789 = vpop.f32.mrf.mxu0
        %v790 = vadd.f32 0.0, %v789
        %v791 = vpop.f32.mrf.mxu0
        %792 = vdwg.mxu0
        %s793 = scalar_lea.vmem %s207, 64 [#allocation5]
        %794 = vst.msk [vmem:[%s793] sm:$0xff] %vm413, %v775
        %795 = vst.msk [vmem:[%s793 + $0x8] sm:$0xff] %vm413, %v780
        %796 = vst.msk [vmem:[%s793 + $0x10] sm:$0xff] %vm413, %v785
        %797 = vst.msk [vmem:[%s793 + $0x18] sm:$0xff] %vm413, %v790
        %s798 = scalar_lea.vmem %s185, 48 [#allocation2]
        %v799 = vld [vmem:[%s798] sm:$0xff]
        %v800 = vld [vmem:[%s798 + $0x8] sm:$0xff]
        %801 = vmatprep.subr.mxu0 0.0
        %802 = vmatpush1.msra.mxu0 0.0
        %803 = vmatprep.subr.mxu0 0.0
        %804 = vmatpush1.msra.mxu0 0.0
        %805 = vmatprep.subr.mxu0 0.0
        %806 = vmatpush1.msra.mxu0 0.0
        %807 = vmatprep.subr.mxu0 0.0
        %808 = vmatpush1.msra.mxu0 0.0
        %809 = vmatprep.subr.mxu0 0.0
        %810 = vmatpush1.msra.mxu0 0.0
        %811 = vmatprep.subr.mxu0 0.0
        %812 = vmatpush1.msra.mxu0 0.0
        %813 = vmatprep.subr.mxu0 0.0
        %814 = vmatpush1.msra.mxu0 0.0
        %815 = vmatprep.subr.mxu0 0.0
        %816 = vmatpush1.msra.mxu0 0.0
        %817 = vmatprep.subr.mxu0 0.0
        %818 = vmatpush1.msra.mxu0 0.0
        %819 = vmatprep.subr.mxu0 0.0
        %820 = vmatpush1.msra.mxu0 0.0
        %821 = vmatprep.subr.mxu0 0.0
        %822 = vmatpush1.msra.mxu0 0.0
        %823 = vmatprep.subr.mxu0 0.0
        %824 = vmatpush1.msra.mxu0 0.0
        %825 = vmatprep.subr.mxu0 0.0
        %826 = vmatpush1.msra.mxu0 0.0
        %827 = vmatprep.subr.mxu0 0.0
        %828 = vmatpush1.msra.mxu0 0.0
        %829 = vmatprep.subr.mxu0 0.0
        %830 = vmatpush1.msra.mxu0 %v800
        %831 = vmatprep.subr.mxu0 0.0
        %832 = vmatpush1.msra.mxu0 %v799
        %833 = vmatprep.subr.mxu0 0.0
        %834 = vmatpush2.msra.mxu0 0.0
        %835 = vmatprep.subr.mxu0 0.0
        %836 = vmatpush2.msra.mxu0 0.0
        %837 = vmatprep.subr.mxu0 0.0
        %838 = vmatpush2.msra.mxu0 0.0
        %839 = vmatprep.subr.mxu0 0.0
        %840 = vmatpush2.msra.mxu0 0.0
        %841 = vmatprep.subr.mxu0 0.0
        %842 = vmatpush2.msra.mxu0 0.0
        %843 = vmatprep.subr.mxu0 0.0
        %844 = vmatpush2.msra.mxu0 0.0
        %845 = vmatprep.subr.mxu0 0.0
        %846 = vmatpush2.msra.mxu0 0.0
        %847 = vmatprep.subr.mxu0 0.0
        %848 = vmatpush2.msra.mxu0 0.0
        %849 = vmatprep.subr.mxu0 0.0
        %850 = vmatpush2.msra.mxu0 0.0
        %851 = vmatprep.subr.mxu0 0.0
        %852 = vmatpush2.msra.mxu0 0.0
        %853 = vmatprep.subr.mxu0 0.0
        %854 = vmatpush2.msra.mxu0 0.0
        %855 = vmatprep.subr.mxu0 0.0
        %856 = vmatpush2.msra.mxu0 0.0
        %857 = vmatprep.subr.mxu0 0.0
        %858 = vmatpush2.msra.mxu0 0.0
        %859 = vmatprep.subr.mxu0 0.0
        %860 = vmatpush2.msra.mxu0 0.0
        %861 = vmatprep.subr.mxu0 0.0
        %862 = vmatpush2.msra.mxu0 0.0
        %863 = vmatprep.subr.mxu0 0.0
        %864 = vmatpush2.msra.mxu0 0.0
        %865 = vmatprep.mubr.f32.mxu0 0.0
        %866 = vmatmul.mubr.f32.gmra.mxu0 %v220
        %v867 = vpop.f32.mrf.mxu0
        %v868 = vadd.f32 0.0, %v867
        %v869 = vpop.f32.mrf.mxu0
        %870 = vmatprep.mubr.f32.mxu0 0.0
        %871 = vmatmul.mubr.f32.gmra.mxu0 %v223
        %v872 = vpop.f32.mrf.mxu0
        %v873 = vadd.f32 0.0, %v872
        %v874 = vpop.f32.mrf.mxu0
        %875 = vmatprep.mubr.f32.mxu0 0.0
        %876 = vmatmul.mubr.f32.gmra.mxu0 %v226
        %v877 = vpop.f32.mrf.mxu0
        %v878 = vadd.f32 0.0, %v877
        %v879 = vpop.f32.mrf.mxu0
        %880 = vmatprep.mubr.f32.mxu0 0.0
        %881 = vmatmul.mubr.f32.gmra.mxu0 %v229
        %v882 = vpop.f32.mrf.mxu0
        %v883 = vadd.f32 0.0, %v882
        %v884 = vpop.f32.mrf.mxu0
        %885 = vdwg.mxu0
        %v887 = vsel %vm218, %v868, 0
        %v890 = vsel %vm218, %v873, 0
        %v893 = vsel %vm218, %v878, 0
        %v896 = vsel %vm218, %v883, 0
        %898 = vmatprep.subr.mxu0 0.0
        %899 = vmatpush1.msra.mxu0 0.0
        %900 = vmatprep.subr.mxu0 0.0
        %901 = vmatpush1.msra.mxu0 0.0
        %902 = vmatprep.subr.mxu0 0.0
        %903 = vmatpush1.msra.mxu0 0.0
        %904 = vmatprep.subr.mxu0 0.0
        %905 = vmatpush1.msra.mxu0 0.0
        %906 = vmatprep.subr.mxu0 0.0
        %907 = vmatpush1.msra.mxu0 0.0
        %908 = vmatprep.subr.mxu0 0.0
        %909 = vmatpush1.msra.mxu0 0.0
        %910 = vmatprep.subr.mxu0 0.0
        %911 = vmatpush1.msra.mxu0 0.0
        %912 = vmatprep.subr.mxu0 0.0
        %913 = vmatpush1.msra.mxu0 0.0
        %914 = vmatprep.subr.mxu0 0.0
        %915 = vmatpush1.msra.mxu0 0.0
        %916 = vmatprep.subr.mxu0 0.0
        %917 = vmatpush1.msra.mxu0 0.0
        %918 = vmatprep.subr.mxu0 0.0
        %919 = vmatpush1.msra.mxu0 0.0
        %920 = vmatprep.subr.mxu0 0.0
        %921 = vmatpush1.msra.mxu0 0.0
        %922 = vmatprep.subr.mxu0 0.0
        %923 = vmatpush1.msra.mxu0 0.0
        %924 = vmatprep.subr.mxu0 0.0
        %925 = vmatpush1.msra.mxu0 0.0
        %926 = vmatprep.subr.mxu0 0.0
        %927 = vmatpush1.msra.mxu0 %v215
        %928 = vmatprep.subr.mxu0 0.0
        %929 = vmatpush1.msra.mxu0 %v214
        %930 = vmatprep.subr.mxu0 0.0
        %931 = vmatpush2.msra.mxu0 0.0
        %932 = vmatprep.subr.mxu0 0.0
        %933 = vmatpush2.msra.mxu0 0.0
        %934 = vmatprep.subr.mxu0 0.0
        %935 = vmatpush2.msra.mxu0 0.0
        %936 = vmatprep.subr.mxu0 0.0
        %937 = vmatpush2.msra.mxu0 0.0
        %938 = vmatprep.subr.mxu0 0.0
        %939 = vmatpush2.msra.mxu0 0.0
        %940 = vmatprep.subr.mxu0 0.0
        %941 = vmatpush2.msra.mxu0 0.0
        %942 = vmatprep.subr.mxu0 0.0
        %943 = vmatpush2.msra.mxu0 0.0
        %944 = vmatprep.subr.mxu0 0.0
        %945 = vmatpush2.msra.mxu0 0.0
        %946 = vmatprep.subr.mxu0 0.0
        %947 = vmatpush2.msra.mxu0 0.0
        %948 = vmatprep.subr.mxu0 0.0
        %949 = vmatpush2.msra.mxu0 0.0
        %950 = vmatprep.subr.mxu0 0.0
        %951 = vmatpush2.msra.mxu0 0.0
        %952 = vmatprep.subr.mxu0 0.0
        %953 = vmatpush2.msra.mxu0 0.0
        %954 = vmatprep.subr.mxu0 0.0
        %955 = vmatpush2.msra.mxu0 0.0
        %956 = vmatprep.subr.mxu0 0.0
        %957 = vmatpush2.msra.mxu0 0.0
        %958 = vmatprep.subr.mxu0 0.0
        %959 = vmatpush2.msra.mxu0 0.0
        %960 = vmatprep.subr.mxu0 0.0
        %961 = vmatpush2.msra.mxu0 0.0
        %962 = vmatprep.mubr.f32.mxu0 0.0
        %963 = vmatmul.mubr.f32.gmra.mxu0 %v887
        %v964 = vpop.f32.mrf.mxu0
        %v965 = vadd.f32 0.0, %v964
        %v966 = vpop.f32.mrf.mxu0
        %967 = vmatprep.mubr.f32.mxu0 0.0
        %968 = vmatmul.mubr.f32.gmra.mxu0 %v890
        %v969 = vpop.f32.mrf.mxu0
        %v970 = vadd.f32 0.0, %v969
        %v971 = vpop.f32.mrf.mxu0
        %972 = vmatprep.mubr.f32.mxu0 0.0
        %973 = vmatmul.mubr.f32.gmra.mxu0 %v893
        %v974 = vpop.f32.mrf.mxu0
        %v975 = vadd.f32 0.0, %v974
        %v976 = vpop.f32.mrf.mxu0
        %977 = vmatprep.mubr.f32.mxu0 0.0
        %978 = vmatmul.mubr.f32.gmra.mxu0 %v896
        %v979 = vpop.f32.mrf.mxu0
        %v980 = vadd.f32 0.0, %v979
        %v981 = vpop.f32.mrf.mxu0
        %982 = vdwg.mxu0
        %s983 = scalar_lea.vmem %s207, 96 [#allocation5]
        %984 = vst.msk [vmem:[%s983] sm:$0xff] %vm413, %v965
        %985 = vst.msk [vmem:[%s983 + $0x8] sm:$0xff] %vm413, %v970
        %986 = vst.msk [vmem:[%s983 + $0x10] sm:$0xff] %vm413, %v975
        %987 = vst.msk [vmem:[%s983 + $0x18] sm:$0xff] %vm413, %v980
        %s988 = sand.u32 %s112, 1
        %s989 = scalar_lea.sflag [#allocation4], %s988
        %s990 = sand.u32 %s112, 1
        %s991 = smul.addr %s990, 128
        %s992 = scalar_lea.vmem [#allocation5], %s991
        // Predicated region
        $region37: #{tpu_custom_call.1} parent=31 // pred_check
          %p993 = pneg %p122
        $region38: #{tpu_custom_call.1} parent=31 // pred_check_branch
          %995 = sbr.rel (%p993) target = $region40
        $region39: #{tpu_custom_call.1} parent=31 // pred_region
          %s996 = smul.u32 4, %s25
          %s998 = ssub.s32 2048, 2048
          %999 = vsyncadd %s989, %s998
          %s1000 = smul.addr %s996, 4
          %s1001 = smul.addr %s24, 16
          %s1002 = sadd.s32 %s1000, %s1001
          %s1003 = smul.addr %s1002, 128
          %s1004 = scalar_lea.hbm %s3, %s1003
          %s1005 = sshll.u32 %s992, 4
          %s1006 = int_to_ptr.vmem [resolvable:$true] %s1005
          %1011 = dma.vmem_to_hbm [thread:$0]  %s1006, 2048, %s1004, %s989, 128, 128, 8
        $region40: #{tpu_custom_call.1} parent=31 // pred_fallthru
          _
      $region32: #{tpu_custom_call.1} parent=5 // pred_fallthru
        _
      %p1012 = scmp.le.s32.totalorder 2, %s15
      // Predicated region
      $region41: #{tpu_custom_call.1} parent=5 // pred_check
        %p1013 = pneg %p1012
      $region42: #{tpu_custom_call.1} parent=5 // pred_check_branch
        %1015 = sbr.rel (%p1013) target = $region44
      $region43: #{tpu_custom_call.1} parent=5 // pred_region
        %s1016 = ssub.s32 %s15, 2
        // Predicated region
        $region45: #{tpu_custom_call.1} parent=43 // pred_check
          %p1017 = pneg %p128
        $region46: #{tpu_custom_call.1} parent=43 // pred_check_branch
          %1019 = sbr.rel (%p1017) target = $region48
        $region47: #{tpu_custom_call.1} parent=43 // pred_region
          %s1020 = sand.u32 %s113, 1
          %s1021 = scalar_lea.sflag [#allocation4], %s1020
          %s1022 = sand.u32 %s113, 1
          %s1023 = smul.addr %s1022, 128
          %s1024 = scalar_lea.vmem [#allocation5], %s1023
          %1025 = dma.done %s1021, 2048
        $region48: #{tpu_custom_call.1} parent=43 // pred_fallthru
          _
      $region44: #{tpu_custom_call.1} parent=5 // pred_fallthru
        _
    $region6: #{tpu_custom_call.1} parent=1 // loop_footer
      %s19 = sadd.s32 1, %s15
    $region7: #{tpu_custom_call.1} parent=1 // loop_footer_branch
      %14 = sbr.rel target = $region3
    $region8: #{tpu_custom_call.1} parent=1 // loop_exit
      _
    %1026 = vsyncpa [#allocation3], 1
    %s1027 = scalar_lea.sflag [#allocation3], 1
    %1028 = vsyncpa %s1027, 1
    %1029 = vsyncpa [#allocation4], 1
    %s1030 = scalar_lea.sflag [#allocation4], 1
    %1031 = vsyncpa %s1030, 1

</llo_original>
